<compile_context>
chip_gen: v5e
topology: v5e:2x2
jax: 0.10.0
libtpu: 0.0.40
codegen_flags: <defaults>
</compile_context>

<pallas_src>
import jax
import jax.numpy as jnp
from jax.experimental import pallas as pl
from jax.experimental.pallas import tpu as pltpu


def _scale_kernel(s_ref, x_ref, o_ref):
    # s_ref: (TR, 1) per-row (i.e. per (n, c)) scale; x_ref/o_ref: (TR, TL) pixel tiles.
    o_ref[...] = (x_ref[...] * s_ref[...]).astype(o_ref.dtype)


def _round_up(x, m):
    return (x + m - 1) // m * m


def scale_module_pallas(x_nchw, weight, *, vmem_limit_bytes=32 * 1024 * 1024):
    """y = weight * x with weight broadcast as [1, C, 1, 1] (per-channel scale).

    x_nchw: (N, C, H, W).  weight: any shape broadcastable to (1, C, 1, 1)
    (the shape _ScaleModule is used with in InceptionWT).
    """
    n, c, h, w = x_nchw.shape
    m, l = n * c, h * w
    dt = x_nchw.dtype
    itemsize = x_nchw.dtype.itemsize

    # Reduce the parameter to a per-channel vector, then to a per-row column for the
    # flattened (N*C, H*W) view.  These are tiny arrays; the big tensor is never copied.
    # TODO(synk): arbitrary `dims` broadcasts other than [1, C, 1, 1] are not handled here.
    w_ch = jnp.broadcast_to(weight, (1, c, 1, 1)).reshape(c).astype(dt)
    s_rows = jnp.broadcast_to(w_ch[None, :], (n, c)).reshape(m, 1)

    x_flat = x_nchw.reshape(m, l)  # metadata-only reshape, NCHW stays in place

    # Lane tile: use the full spatial row unless it is huge and 128-aligned.
    if l % 128 == 0 and l > 16384:
        tl = 16384
    else:
        tl = l  # equal-to-full-extent blocks are always legal

    # Row tile: multiple of 8, large enough to amortize ~0.35us per grid step, capped so
    # a double-buffered (in + out) block stays well inside even v5e's default scoped VMEM.
    bytes_per_row = max(tl * itemsize, 1)
    max_rows = max(8, ((2 * 1024 * 1024) // bytes_per_row) // 8 * 8)
    tr = min(_round_up(m, 8), 1024, max_rows)
    # Keep at least 2 row blocks when there is enough work, so v7x's 2 TCs both run.
    if m >= 16 and pl.cdiv(m, tr) < 2:
        tr = max(8, _round_up(pl.cdiv(m, 2), 8))

    grid = (pl.cdiv(m, tr), pl.cdiv(l, tl))

    out_flat = pl.pallas_call(
        _scale_kernel,
        out_shape=jax.ShapeDtypeStruct((m, l), dt),
        grid_spec=pltpu.PrefetchScalarGridSpec(
            num_scalar_prefetch=0,
            grid=grid,
            in_specs=[
                pl.BlockSpec((tr, 1), lambda i, j: (i, 0)),    # per-row scale
                pl.BlockSpec((tr, tl), lambda i, j: (i, j)),   # x tile
            ],
            out_specs=pl.BlockSpec((tr, tl), lambda i, j: (i, j)),
        ),
        compiler_params=pltpu.CompilerParams(
            dimension_semantics=("parallel", "parallel"),
            vmem_limit_bytes=vmem_limit_bytes,
        ),
    )(s_rows, x_flat)

    return out_flat.reshape(n, c, h, w)


def scale_module_ref(x_nchw, weight):
    """Pure-JAX reference matching the PyTorch forward: torch.mul(weight, x)."""
    return weight * x_nchw


if __name__ == "__main__":
    key = jax.random.PRNGKey(0)
    k_x, k_w = jax.random.split(key)

    N, C, H, W = 2, 4, 16, 16
    x = jax.random.normal(k_x, (N, C, H, W), jnp.float32)

    # _ScaleModule(dims=[1, C, 1, 1], init_scale=0.1) initializes weight = 0.1 * ones;
    # as a trainable parameter it can take arbitrary values, so test with perturbed ones.
    weight = 0.1 + 0.05 * jax.random.normal(k_w, (1, C, 1, 1), jnp.float32)

    out = scale_module_pallas(x, weight)
    out = jax.block_until_ready(out)

    ref = scale_module_ref(x, weight)
    assert out.shape == (N, C, H, W)
    assert jnp.allclose(out, ref, atol=1e-6, rtol=1e-6)

    print("KERNEL_OK")
</pallas_src>

<mosaic_0001>
module attributes {stable_mosaic.version = 11 : i64} {
  func.func @_scale_kernel(%arg0: i32, %arg1: i32, %arg2: memref<8x1xf32, #tpu.memory_space<vmem>>, %arg3: memref<8x256xf32, #tpu.memory_space<vmem>>, %arg4: memref<8x256xf32, #tpu.memory_space<vmem>>) attributes {dimension_semantics = [#tpu.dimension_semantics<parallel>, #tpu.dimension_semantics<parallel>], iteration_bounds = array<i64: 1, 1>, scalar_prefetch = 0 : i64, scratch_operands = 0 : i64, tpu.core_type = #tpu.core_type<tc>, window_params = [{transform_indices = @transform_0, window_bounds = array<i64: 8, 1>}, {transform_indices = @transform_1, window_bounds = array<i64: 8, 256>}, {transform_indices = @transform_2, window_bounds = array<i64: 8, 256>}]} {
    %c0 = arith.constant 0 : index
    %c0_0 = arith.constant 0 : index
    %0 = vector.load %arg3[%c0, %c0_0] : memref<8x256xf32, #tpu.memory_space<vmem>>, vector<8x256xf32>
    %c0_1 = arith.constant 0 : index
    %c0_2 = arith.constant 0 : index
    %1 = vector.load %arg2[%c0_1, %c0_2] : memref<8x1xf32, #tpu.memory_space<vmem>>, vector<8x1xf32>
    %2 = vector.broadcast %1 : vector<8x1xf32> to vector<8x256xf32>
    %3 = arith.mulf %0, %2 : vector<8x256xf32>
    %c0_3 = arith.constant 0 : index
    %c0_4 = arith.constant 0 : index
    %4 = vector.load %arg4[%c0_3, %c0_4] : memref<8x256xf32, #tpu.memory_space<vmem>>, vector<8x256xf32>
    tpu.vector_store %arg4[%c0_3, %c0_4], %3 {strides = array<i32>} : memref<8x256xf32, #tpu.memory_space<vmem>>, vector<8x256xf32>,
    return
  }
  func.func @transform_0(%arg0: i32, %arg1: i32) -> (i32, i32) {
    %c0_i32 = arith.constant 0 : i32
    %c0_i32_0 = arith.constant 0 : i32
    return %arg0, %c0_i32 : i32, i32
  }
  func.func @transform_1(%arg0: i32, %arg1: i32) -> (i32, i32) {
    %c0_i32 = arith.constant 0 : i32
    return %arg0, %arg1 : i32, i32
  }
  func.func @transform_2(%arg0: i32, %arg1: i32) -> (i32, i32) {
    %c0_i32 = arith.constant 0 : i32
    return %arg0, %arg1 : i32, i32
  }
}

</mosaic_0001>

<llo_original>
// kernel: tpu_custom_call.1
$region0: #{tpu_custom_call.1}
  #allocation0 [shape = 'u32[]', space=smem, size = 0x4, offset = 0x4, fixed_abs, tag = 'smem constant byte address 0x4 - core index']
  #allocation1 [shape = 'u32[72,128]{1,0:T(1,128)}', space=vmem, size = 0x9000, scoped, tag = 'internal scratch']
  %s0 = inlined_call_operand.vmem [shape: f32[8,1], index: 0, kind: input, shape index: {}]
  %s1 = inlined_call_operand.hbm [shape: f32[8,256], index: 1, kind: input, shape index: {}]
  %s2 = inlined_call_operand.hbm [shape: f32[8,256], index: 2, kind: output, shape index: {}]
  %s3 = sld [smem:[#allocation0]]
  $region22: #{tpu_custom_call.1} parent=0
    _
  %s5 = ssub.s32 1, %s3
  %s6 = scalar_select 0, %s5, %s3
  $region1: #{tpu_custom_call.1} parent=0
    #allocation2 [shape = 'u8[8192]{0}', space=vmem, size = 0x2000, scoped, tag = 'input window, operand 1, single buffered']
    #allocation3 [shape = 's32[1]{0}', space=sflag, size = 0x4, scoped, tag = 'scoped memory for tpu_custom_call.1']
    #allocation4 [shape = 's32[1]{0}', space=sflag, size = 0x4, scoped, tag = 'scoped memory for tpu_custom_call.1']
    #allocation5 [shape = 'u8[8192]{0}', space=vmem, size = 0x2000, scoped, tag = 'output window, operand 0, single buffered']
    %7 = vsyncpa [#allocation3], 0
    %8 = vsyncpa [#allocation4], 0
    // Predicated region
    $region2: #{tpu_custom_call.1} parent=1 // pred_check
      _
    $region3: #{tpu_custom_call.1} parent=1 // pred_check_branch
      %10 = sbr.rel (0) target = $region5
    $region4: #{tpu_custom_call.1} parent=1 // pred_region
      _
    $region5: #{tpu_custom_call.1} parent=1 // pred_fallthru
      _
    // Predicated region
    $region6: #{tpu_custom_call.1} parent=1 // pred_check
      _
    $region7: #{tpu_custom_call.1} parent=1 // pred_check_branch
      %12 = sbr.rel (0) target = $region9
    $region8: #{tpu_custom_call.1} parent=1 // pred_region
      %14 = vsyncadd [#allocation3], 0
      %s16 = sshll.u32 %s1, 4
      %s17 = int_to_ptr.hbm [resolvable:$true] %s16
      %s18 = sshll.u32 [#allocation2], 4
      %s19 = int_to_ptr.vmem [resolvable:$true] %s18
      %21 = dma.hbm_to_vmem [thread:$0]  %s17, 256, %s19, [#allocation3]
    $region9: #{tpu_custom_call.1} parent=1 // pred_fallthru
      _
    // Predicated region
    $region10: #{tpu_custom_call.1} parent=1 // pred_check
      _
    $region11: #{tpu_custom_call.1} parent=1 // pred_check_branch
      %23 = sbr.rel (0) target = $region13
    $region12: #{tpu_custom_call.1} parent=1 // pred_region
      %25 = dma.done [#allocation3], 256
    $region13: #{tpu_custom_call.1} parent=1 // pred_fallthru
      _
    %v26 = vld [vmem:[#allocation2] sm:$0xff]
    %v27 = vld [vmem:[#allocation2 + $0x8] sm:$0xff]
    %v28 = vld [vmem:[%s0] sm:$0xff]
    %30 = vset.pattern.permute.xlu0 0
    %31 = vperm.xlu0 %30, %v28
    %v32 = vpop.permute.xlu0 %31
    %v34 = vmul.f32 %v26, %v32
    %v35 = vmul.f32 %v27, %v32
    %36 = vst [vmem:[#allocation5] sm:$0xff] %v34
    %37 = vst [vmem:[#allocation5 + $0x8] sm:$0xff] %v35
    // Predicated region
    $region14: #{tpu_custom_call.1} parent=1 // pred_check
      _
    $region15: #{tpu_custom_call.1} parent=1 // pred_check_branch
      %39 = sbr.rel (0) target = $region17
    $region16: #{tpu_custom_call.1} parent=1 // pred_region
      %41 = vsyncadd [#allocation4], 0
      %s43 = sshll.u32 [#allocation5], 4
      %s44 = int_to_ptr.vmem [resolvable:$true] %s43
      %s45 = sshll.u32 %s2, 4
      %s46 = int_to_ptr.hbm [resolvable:$true] %s45
      %48 = dma.vmem_to_hbm [thread:$0]  %s44, 256, %s46, [#allocation4]
    $region17: #{tpu_custom_call.1} parent=1 // pred_fallthru
      _
    // Predicated region
    $region18: #{tpu_custom_call.1} parent=1 // pred_check
      _
    $region19: #{tpu_custom_call.1} parent=1 // pred_check_branch
      %50 = sbr.rel (0) target = $region21
    $region20: #{tpu_custom_call.1} parent=1 // pred_region
      %52 = dma.done [#allocation4], 256
    $region21: #{tpu_custom_call.1} parent=1 // pred_fallthru
      _
    %53 = vsyncpa [#allocation3], 1
    %54 = vsyncpa [#allocation4], 1

</llo_original>
